<compile_context>
chip_gen: v5e
topology: v5e:2x2
jax: 0.10.0
libtpu: 0.0.40
codegen_flags: <defaults>
</compile_context>

<pallas_src>
import functools

import jax
import jax.numpy as jnp
from jax.experimental import pallas as pl
from jax.experimental.pallas import tpu as pltpu

LANES = 128
COORDS = 4
BOXES_PER_ROW = LANES // COORDS        # 32 boxes per 128-lane row
MAX_BLOCK_SUBLANES = 1024              # 512 KiB / input block / stream
FAST_PATH_BOXES = 4096                 # below this, use the fused-XLA path


def _num_tensorcores():
    """2 on multi-TensorCore chips (v7x / v4 / v5p), else 1 (v5e / v6e)."""
    try:
        kind = jax.devices()[0].device_kind.lower()
    except Exception:
        return 1
    if any(tag in kind for tag in ("v4", "v5p", "v7", "7x")):
        return 2
    return 1


_ROLL_SIGN = None  # +1 if pltpu.roll(x, s)[i] == x[i+s], -1 if jnp.roll-like


def _roll_probe():
    """Determine pltpu.roll's lane-rotation direction once (tiny one-off kernel)."""
    global _ROLL_SIGN
    if _ROLL_SIGN is None:
        def probe(x_ref, o_ref):
            o_ref[...] = pltpu.roll(x_ref[...], 1, 1)

        x = jax.lax.broadcasted_iota(jnp.float32, (8, LANES), 1)
        y = pl.pallas_call(
            probe, out_shape=jax.ShapeDtypeStruct((8, LANES), jnp.float32))(x)
        first = float(y[0, 0])
        if first == float(LANES - 1):     # jnp.roll semantics: out[i] = x[i - s]
            _ROLL_SIGN = -1
        elif first == 1.0:                # out[i] = x[i + s]
            _ROLL_SIGN = 1
        else:
            raise RuntimeError(f"unexpected pltpu.roll semantics (probe={first})")
    return _ROLL_SIGN


def _left_shift_amount(s):
    """Static roll amount so that result[:, i] == x[:, i + s] (cyclic)."""
    return (_roll_probe() * s) % LANES


def _diou_kernel(p_ref, t_ref, o_ref, *, eps, amt1, amt2):
    """Accumulates per-box DIoU values into a resident (8,128) per-core block.

    p_ref/t_ref: (bs, 128) float32, lanes interleaved x1,y1,x2,y2 (32 boxes/row).
    Per-box results are produced in lanes 4j; other lanes are junk and masked.
    """
    @pl.when(pl.program_id(1) == 0)
    def _():
        o_ref[...] = jnp.zeros(o_ref.shape, o_ref.dtype)

    def sl1(x):  # lane i <- x[i + 1]
        return pltpu.roll(x, amt1, 1)

    def sl2(x):  # lane i <- x[i + 2]
        return pltpu.roll(x, amt2, 1)

    p = p_ref[...]
    t = t_ref[...]
    bs = p.shape[0]

    mn = jnp.minimum(p, t)
    mx = jnp.maximum(p, t)
    p2 = sl2(p)          # lane 4j: px2 ; 4j+1: py2
    t2 = sl2(t)
    mx2 = sl2(mx)        # lane 4j: max(px2,tx2) ; 4j+1: max(py2,ty2)
    mn2 = sl2(mn)        # lane 4j: min(px2,tx2) ; 4j+1: min(py2,ty2)

    # Smallest enclosing box diagonal^2 (valid in lanes 4j).
    outer = mx2 - mn                      # 4j: ow ; 4j+1: oh
    outer_sq = outer * outer
    outer_diag = outer_sq + sl1(outer_sq)

    # 4 * center distance^2 (valid in lanes 4j).
    # TODO(synk): upstream Diou_loss indexes target_ctr[0]/target_ctr[1] (a typo
    # that only broadcasts when n==2); standard per-box centers implemented.
    d = (p + p2) - (t + t2)               # 4j: (px1+px2)-(tx1+tx2) ; 4j+1: y
    d_sq = d * d
    ctr4 = d_sq + sl1(d_sq)               # 4j: 4*ctr_dis

    # Aligned IoU (mmdet bbox_overlaps(..., is_aligned=True)), clamped to eps.
    iwh = jnp.maximum(mn2 - mx, 0.0)      # 4j: iw ; 4j+1: ih
    overlap = iwh * sl1(iwh)              # 4j: iw*ih
    pw = p2 - p                           # 4j: pred w ; 4j+1: pred h
    tw = t2 - t
    union = pw * sl1(pw) + tw * sl1(tw) - overlap
    # TODO(synk): real mmdet bbox_overlaps also clamps `union`; the shown spec
    # only clamps the IoU, so degenerate boxes give inf/NaN like the reference.

    inv_u = pl.reciprocal(union, approx=True)
    inv_u = inv_u * (2.0 - union * inv_u)            # one Newton step -> ~f32
    ious = jnp.maximum(overlap * inv_u, eps)

    inv_d = pl.reciprocal(outer_diag, approx=True)
    inv_d = inv_d * (2.0 - outer_diag * inv_d)
    dious = ious - 0.25 * (ctr4 * inv_d)

    lane = jax.lax.broadcasted_iota(jnp.int32, (bs, LANES), 1)
    contrib = jnp.where((lane & 3) == 0, dious, 0.0)  # keep lanes 4j only

    # Fold (bs,128) -> (8,128) and accumulate into the resident output block.
    o_ref[...] += jnp.sum(contrib.reshape(bs // 8, 8, LANES), axis=0)


@functools.partial(
    jax.jit,
    static_argnames=("eps", "num_cores", "bs", "tiles", "amt1", "amt2"))
def _diou_sum_pallas(pred, target, *, eps, num_cores, bs, tiles, amt1, amt2):
    n = pred.shape[0]
    rows = bs * tiles * num_cores
    npad = rows * BOXES_PER_ROW

    pred = pred.astype(jnp.float32)
    target = target.astype(jnp.float32)
    if npad != n:
        # Identity pad box (0,0,1,1) for both pred & target -> DIoU == 1, which
        # cancels exactly in `npad - sum(dious)` below.
        pad = jnp.broadcast_to(
            jnp.array([0.0, 0.0, 1.0, 1.0], jnp.float32), (npad - n, COORDS))
        pred = jnp.concatenate([pred, pad], axis=0)
        target = jnp.concatenate([target, pad], axis=0)

    p2d = pred.reshape(rows, LANES)      # free reshape (row-major interleave)
    t2d = target.reshape(rows, LANES)

    kernel = functools.partial(_diou_kernel, eps=float(eps), amt1=amt1, amt2=amt2)

    partial_dious = pl.pallas_call(
        kernel,
        out_shape=jax.ShapeDtypeStruct((num_cores, 8, LANES), jnp.float32),
        grid_spec=pltpu.PrefetchScalarGridSpec(
            num_scalar_prefetch=0,
            grid=(num_cores, tiles),
            in_specs=[
                pl.BlockSpec((bs, LANES), lambda c, i: (c * tiles + i, 0)),
                pl.BlockSpec((bs, LANES), lambda c, i: (c * tiles + i, 0)),
            ],
            out_specs=pl.BlockSpec((None, 8, LANES), lambda c, i: (c, 0, 0)),
        ),
        compiler_params=pltpu.CompilerParams(
            dimension_semantics=("parallel", "arbitrary"),
            vmem_limit_bytes=32 * 1024 * 1024),
    )(p2d, t2d)

    # sum over boxes of (1 - dious) == npad - sum(dious); pad boxes cancel.
    return npad - jnp.sum(partial_dious)


def _diou_loss_ref(pred, target, eps=1e-3):
    """Pure-JAX per-box reference (mirrors the PyTorch math, typo corrected)."""
    lt = jnp.minimum(pred[:, :2], target[:, :2])
    rb = jnp.maximum(pred[:, 2:], target[:, 2:])
    outer = rb - lt
    outer_diag = outer[:, 0] ** 2 + outer[:, 1] ** 2
    pctr = (pred[:, :2] + pred[:, 2:]) * 0.5
    tctr = (target[:, :2] + target[:, 2:]) * 0.5
    ctr_dis = (pctr[:, 0] - tctr[:, 0]) ** 2 + (pctr[:, 1] - tctr[:, 1]) ** 2
    ilt = jnp.maximum(pred[:, :2], target[:, :2])
    irb = jnp.minimum(pred[:, 2:], target[:, 2:])
    wh = jnp.maximum(irb - ilt, 0.0)
    overlap = wh[:, 0] * wh[:, 1]
    ap = (pred[:, 2] - pred[:, 0]) * (pred[:, 3] - pred[:, 1])
    at = (target[:, 2] - target[:, 0]) * (target[:, 3] - target[:, 1])
    ious = jnp.maximum(overlap / (ap + at - overlap), eps)
    return 1.0 - (ious - ctr_dis / outer_diag)


@jax.jit
def _diou_sum_ref(pred, target, eps):
    return jnp.sum(_diou_loss_ref(pred, target, eps))


def diou_loss_sum(pred, target, eps=1e-3, min_pallas_boxes=FAST_PATH_BOXES):
    """Sum over boxes of the per-box DIoU loss. pred/target: (n, 4) x1y1x2y2."""
    assert pred.shape == target.shape and pred.shape[-1] == COORDS
    n = pred.shape[0]
    if n == 0:
        return jnp.float32(0.0)
    if n < max(int(min_pallas_boxes), 1):
        # Small-n fast path: one fused XLA elementwise+reduce beats kernel
        # launch + padding at typical detection batch sizes.
        return _diou_sum_ref(pred, target, float(eps))

    num_cores = _num_tensorcores()
    rows_needed = -(-n // BOXES_PER_ROW)
    rows_per_core = -(-rows_needed // num_cores)
    tiles = max(1, -(-rows_per_core // MAX_BLOCK_SUBLANES))
    bs = -(-rows_per_core // tiles)
    bs = -(-bs // 8) * 8                 # block height, multiple of 8 sublanes
    amt1 = _left_shift_amount(1)
    amt2 = _left_shift_amount(2)
    return _diou_sum_pallas(
        pred, target, eps=float(eps), num_cores=num_cores, bs=bs, tiles=tiles,
        amt1=amt1, amt2=amt2)


class DIoULoss:
    """JAX/Pallas port of the PyTorch DIoULoss module (forward only)."""

    def __init__(self, beta=0.2, eps=1e-3, reduction='mean', loss_weight=1.0):
        self.beta = beta            # unused by forward (kept for parity)
        self.eps = eps
        self.reduction = reduction
        self.loss_weight = loss_weight

    def __call__(self, pred, target, weight=None, avg_factor=None,
                 reduction_override=None):
        assert reduction_override in (None, 'none', 'mean', 'sum')
        reduction = reduction_override if reduction_override else self.reduction
        # TODO(synk): this zero-weight shortcut concretizes `weight` and will
        # not work under jit with a traced weight array (parity with upstream).
        if weight is not None and not bool(jnp.any(weight > 0)):
            return (pred * weight).sum()
        # TODO(synk): non-None `weight` and reduction='none' (per-element output)
        # paths are not implemented in-kernel; default weight=None / mean path is.
        assert weight is None, "weighted path not implemented in the kernel"
        assert reduction in ('mean', 'sum'), "'none' reduction not implemented"

        total = diou_loss_sum(pred, target, eps=self.eps)
        if reduction == 'mean':
            denom = float(avg_factor) if avg_factor is not None else float(pred.shape[0])
            loss = total / denom
        else:
            loss = total
        return self.loss_weight * loss


if __name__ == "__main__":
    key = jax.random.PRNGKey(0)

    def make_boxes(k, n):
        k1, k2 = jax.random.split(k)
        xy = jax.random.uniform(k1, (n, 2), jnp.float32, 0.0, 10.0)
        wh = jax.random.uniform(k2, (n, 2), jnp.float32, 1.0, 5.0)
        return jnp.concatenate([xy, xy + wh], axis=1)

    # 1) Exercise the Pallas kernel directly (forced, even at small n) against
    #    the pure-JAX reference.  1e-4 tolerance covers the approx-reciprocal +
    #    Newton-step path (typical error ~1e-7).
    for n in (8, 1000):
        key, kp, kt = jax.random.split(key, 3)
        pred = make_boxes(kp, n)
        target = make_boxes(kt, n)
        got = jax.block_until_ready(
            diou_loss_sum(pred, target, eps=1e-3, min_pallas_boxes=0))
        want = jnp.sum(_diou_loss_ref(pred, target, eps=1e-3))
        assert jnp.allclose(got, want, rtol=1e-4, atol=1e-4), (n, got, want)

    # 2) Module-level forward (mean reduction; this small n takes the fused-XLA
    #    fast path, as recommended by the review).
    key, kp, kt = jax.random.split(key, 3)
    pred = make_boxes(kp, 8)
    target = make_boxes(kt, 8)
    loss_fn = DIoULoss(beta=0.2, eps=1e-3, reduction='mean', loss_weight=1.0)
    loss = jax.block_until_ready(loss_fn(pred, target))
    ref = jnp.mean(_diou_loss_ref(pred, target, eps=1e-3))
    assert jnp.allclose(loss, ref, rtol=1e-4, atol=1e-4), (loss, ref)

    print("KERNEL_OK")
</pallas_src>

<mosaic_0001>
module attributes {stable_mosaic.version = 11 : i64} {
  func.func @probe(%arg0: memref<8x128xf32, #tpu.memory_space<vmem>>, %arg1: memref<8x128xf32, #tpu.memory_space<vmem>>) attributes {dimension_semantics = [], scalar_prefetch = 0 : i64, scratch_operands = 0 : i64, tpu.core_type = #tpu.core_type<tc>} {
    %c0 = arith.constant 0 : index
    %c0_0 = arith.constant 0 : index
    %0 = vector.load %arg0[%c0, %c0_0] : memref<8x128xf32, #tpu.memory_space<vmem>>, vector<8x128xf32>
    %c1_i32 = arith.constant 1 : i32
    %1 = tpu.dynamic_rotate %0 by %c1_i32 dim 1 : vector<8x128xf32>, i32 -> vector<8x128xf32>
    %c0_1 = arith.constant 0 : index
    %c0_2 = arith.constant 0 : index
    %2 = vector.load %arg1[%c0_1, %c0_2] : memref<8x128xf32, #tpu.memory_space<vmem>>, vector<8x128xf32>
    tpu.vector_store %arg1[%c0_1, %c0_2], %1 {strides = array<i32>} : memref<8x128xf32, #tpu.memory_space<vmem>>, vector<8x128xf32>,
    return
  }
}

</mosaic_0001>

<llo_original>
// kernel: tpu_custom_call.1
$region0: #{tpu_custom_call.1}
  #allocation0 [shape = 'u32[]', space=smem, size = 0x4, offset = 0x4, fixed_abs, tag = 'smem constant byte address 0x4 - core index']
  #allocation1 [shape = 'u32[72,128]{1,0:T(1,128)}', space=vmem, size = 0x9000, scoped, tag = 'internal scratch']
  %s0 = inlined_call_operand.hbm [shape: f32[8,128], index: 0, kind: input, shape index: {}]
  %s1 = inlined_call_operand.hbm [shape: f32[8,128], index: 1, kind: output, shape index: {}]
  %s2 = sld [smem:[#allocation0]]
  $region18: #{tpu_custom_call.1} parent=0
    _
  %s4 = ssub.s32 1, %s2
  %s5 = scalar_select 0, %s4, %s2
  $region1: #{tpu_custom_call.1} parent=0
    #allocation2 [shape = 'u8[4096]{0}', space=vmem, size = 0x1000, scoped, tag = 'input window, operand 0, single buffered']
    #allocation3 [shape = 's32[1]{0}', space=sflag, size = 0x4, scoped, tag = 'scoped memory for tpu_custom_call.1']
    #allocation4 [shape = 's32[1]{0}', space=sflag, size = 0x4, scoped, tag = 'scoped memory for tpu_custom_call.1']
    #allocation5 [shape = 'u8[4096]{0}', space=vmem, size = 0x1000, scoped, tag = 'output window, operand 0, single buffered']
    %6 = vsyncpa [#allocation3], 0
    %7 = vsyncpa [#allocation4], 0
    // Predicated region
    $region2: #{tpu_custom_call.1} parent=1 // pred_check
      _
    $region3: #{tpu_custom_call.1} parent=1 // pred_check_branch
      %9 = sbr.rel (0) target = $region5
    $region4: #{tpu_custom_call.1} parent=1 // pred_region
      %11 = vsyncadd [#allocation3], 0
      %s13 = sshll.u32 %s0, 4
      %s14 = int_to_ptr.hbm [resolvable:$true] %s13
      %s15 = sshll.u32 [#allocation2], 4
      %s16 = int_to_ptr.vmem [resolvable:$true] %s15
      %18 = dma.hbm_to_vmem [thread:$0]  %s14, 128, %s16, [#allocation3]
    $region5: #{tpu_custom_call.1} parent=1 // pred_fallthru
      _
    // Predicated region
    $region6: #{tpu_custom_call.1} parent=1 // pred_check
      _
    $region7: #{tpu_custom_call.1} parent=1 // pred_check_branch
      %20 = sbr.rel (0) target = $region9
    $region8: #{tpu_custom_call.1} parent=1 // pred_region
      %22 = dma.done [#allocation3], 128
    $region9: #{tpu_custom_call.1} parent=1 // pred_fallthru
      _
    %v23 = vld [vmem:[#allocation2] sm:$0xff]
    %24 = vrot.lane.b32.xlu0 %v23, 1
    %v25 = vpop.permute.xlu0 %24
    %26 = vst [vmem:[#allocation5] sm:$0xff] %v25
    // Predicated region
    $region10: #{tpu_custom_call.1} parent=1 // pred_check
      _
    $region11: #{tpu_custom_call.1} parent=1 // pred_check_branch
      %28 = sbr.rel (0) target = $region13
    $region12: #{tpu_custom_call.1} parent=1 // pred_region
      %30 = vsyncadd [#allocation4], 0
      %s32 = sshll.u32 [#allocation5], 4
      %s33 = int_to_ptr.vmem [resolvable:$true] %s32
      %s34 = sshll.u32 %s1, 4
      %s35 = int_to_ptr.hbm [resolvable:$true] %s34
      %37 = dma.vmem_to_hbm [thread:$0]  %s33, 128, %s35, [#allocation4]
    $region13: #{tpu_custom_call.1} parent=1 // pred_fallthru
      _
    // Predicated region
    $region14: #{tpu_custom_call.1} parent=1 // pred_check
      _
    $region15: #{tpu_custom_call.1} parent=1 // pred_check_branch
      %39 = sbr.rel (0) target = $region17
    $region16: #{tpu_custom_call.1} parent=1 // pred_region
      %41 = dma.done [#allocation4], 128
    $region17: #{tpu_custom_call.1} parent=1 // pred_fallthru
      _
    %42 = vsyncpa [#allocation3], 1
    %43 = vsyncpa [#allocation4], 1

</llo_original>
